<compile_context>
chip_gen: v5e
topology: v5e:2x2
jax: 0.10.0
libtpu: 0.0.40
codegen_flags: <defaults>
</compile_context>

<pallas_src>
import math
import numpy as np
import jax
import jax.numpy as jnp
from jax.experimental import pallas as pl
from jax.experimental.pallas import tpu as pltpu

_LANE = 128
_SUBLANE_F32 = 8
_SUBLANE_PACKED = 16


def build_pe_buffer(d_model: int, max_len: int = 5000, dtype=jnp.float32) -> jnp.ndarray:
    """Sinusoidal PE table, identical to the PyTorch module's __init__."""
    position = np.arange(0, max_len, dtype=np.float32)[:, None]              # (max_len, 1)
    div_term = np.exp(
        np.arange(0, d_model, 2, dtype=np.float32) * (-math.log(10000.0) / d_model))
    pe = np.zeros((max_len, d_model), dtype=np.float32)
    pe[:, 0::2] = np.sin(position * div_term)
    pe[:, 1::2] = np.cos(position * div_term[: d_model // 2])                # odd d_model safe
    return jnp.asarray(pe, dtype=dtype)


def _vmem_cap_bytes() -> int:
    try:
        cap = int(pltpu.get_tpu_info().vmem_capacity_bytes)
        if cap > 0:
            return cap
    except Exception:
        pass
    return 64 * 1024 * 1024          # conservative default (v7x per-TC VMEM)


def _block_budget_bytes() -> int:
    # ~8 MiB per grid step on 128 MiB-VMEM parts (v5e/v6e), ~6.4 MiB on 64 MiB (v7x).
    return min(8 * 1024 * 1024, _vmem_cap_bytes() // 10)


def _vmem_limit(per_step_bytes: int) -> int:
    need = 2 * per_step_bytes + (8 << 20)          # double-buffered streams + headroom
    cap = (_vmem_cap_bytes() * 3) // 4
    return int(min(max(need, 16 << 20), cap))


def _pe_add_kernel(x_ref, pe_ref, o_ref):
    # Pure bandwidth-bound stream: load, load, add (promotes if pe is f32), store.
    o_ref[...] = (x_ref[...] + pe_ref[...]).astype(o_ref.dtype)


def positional_encoding(x: jnp.ndarray, pe: jnp.ndarray) -> jnp.ndarray:
    """x: (B, S, D); pe: (max_len, D). Returns x + pe[:S] broadcast over batch."""
    B, S, D = x.shape
    assert pe.shape[0] >= S and pe.shape[1] == D, "pe table too small for input"
    x_isz = jnp.dtype(x.dtype).itemsize
    pe_isz = jnp.dtype(pe.dtype).itemsize
    cost = pl.CostEstimate(
        flops=B * S * D,
        transcendentals=0,
        bytes_accessed=2 * B * S * D * x_isz + S * D * pe_isz,
    )

    if D % _LANE == 0:
        # ------------------- main lane-dense path -------------------
        budget = _block_budget_bytes()
        sub = _SUBLANE_F32 if x_isz >= 4 else _SUBLANE_PACKED
        row_bytes = D * (2 * x_isz + pe_isz)        # x + out + pe bytes per sequence row
        if S < sub or S * row_bytes <= budget:
            ts = S                                   # whole sequence in one tile
        else:
            ts = max(sub, min((budget // row_bytes) // sub * sub, (S // sub) * sub))
        s_tiles = pl.cdiv(S, ts)

        # If the tile is the full (non-sublane-aligned) sequence, give pe a
        # full-extent view so its block shape equals its array shape.
        pe_in = pe if (ts % _SUBLANE_F32 == 0 or pe.shape[0] == S) else pe[:S, :]

        per_step = ts * row_bytes
        return pl.pallas_call(
            _pe_add_kernel,
            out_shape=jax.ShapeDtypeStruct((B, S, D), x.dtype),
            grid_spec=pltpu.PrefetchScalarGridSpec(
                num_scalar_prefetch=0,
                # Batch innermost: pe's block index (s, 0) is constant across the
                # inner loop, so Pallas DMAs each pe tile exactly once.
                grid=(s_tiles, B),
                in_specs=[
                    pl.BlockSpec((pl.Squeezed(), ts, D), lambda s, b: (b, s, 0)),
                    pl.BlockSpec((ts, D), lambda s, b: (s, 0)),
                ],
                out_specs=pl.BlockSpec((pl.Squeezed(), ts, D), lambda s, b: (b, s, 0)),
            ),
            compiler_params=pltpu.CompilerParams(
                dimension_semantics=("parallel", "parallel"),
                vmem_limit_bytes=_vmem_limit(per_step),
            ),
            cost_estimate=cost,
        )(x, pe_in)

    # ---------- fallback: small / non-128-multiple d_model (e.g. D=32) ----------
    # Flatten (S, D) so stores are lane-dense instead of per-vreg masked.
    # TODO(synk): for tiny shapes, fuse this add into the neighboring embedding /
    # first-attention kernel instead of a standalone pallas_call.
    F = S * D
    x2 = x.reshape(B, F)
    pe_flat = pe[:S, :].reshape(1, F)
    budget = _block_budget_bytes()
    col_bytes = 2 * B * x_isz + pe_isz              # x + out + pe bytes per flat column
    if F < _LANE or F * col_bytes <= budget:
        tf = F
    else:
        tf = max(_LANE, min((budget // col_bytes) // _LANE * _LANE, (F // _LANE) * _LANE))
    f_tiles = pl.cdiv(F, tf)
    out2 = pl.pallas_call(
        _pe_add_kernel,
        out_shape=jax.ShapeDtypeStruct((B, F), x.dtype),
        grid_spec=pltpu.PrefetchScalarGridSpec(
            num_scalar_prefetch=0,
            grid=(f_tiles,),
            in_specs=[
                pl.BlockSpec((B, tf), lambda f: (0, f)),
                pl.BlockSpec((1, tf), lambda f: (0, f)),
            ],
            out_specs=pl.BlockSpec((B, tf), lambda f: (0, f)),
        ),
        compiler_params=pltpu.CompilerParams(
            dimension_semantics=("parallel",),
            vmem_limit_bytes=_vmem_limit(tf * col_bytes),
        ),
        cost_estimate=cost,
    )(x2, pe_flat)
    return out2.reshape(B, S, D)


if __name__ == "__main__":
    key = jax.random.PRNGKey(0)
    k1, k2, k3 = jax.random.split(key, 3)

    # Case 1: small d_model (32 < 128) -> flattened lane-dense fallback path.
    B, S, D = 2, 8, 32
    pe_a = build_pe_buffer(D, max_len=64)
    x_a = jax.random.normal(k1, (B, S, D), dtype=jnp.float32)
    out_a = jax.block_until_ready(positional_encoding(x_a, pe_a))
    ref_a = x_a + pe_a[None, :S, :]
    np.testing.assert_allclose(np.asarray(out_a), np.asarray(ref_a), rtol=1e-6, atol=1e-6)

    # Case 2: d_model multiple of 128 -> main tiled path, full pe table passed in.
    B2, S2, D2 = 2, 16, 128
    pe_b = build_pe_buffer(D2, max_len=32)
    x_b = jax.random.normal(k2, (B2, S2, D2), dtype=jnp.float32)
    out_b = jax.block_until_ready(positional_encoding(x_b, pe_b))
    ref_b = x_b + pe_b[None, :S2, :]
    np.testing.assert_allclose(np.asarray(out_b), np.asarray(ref_b), rtol=1e-6, atol=1e-6)

    # Case 3: sequence length not a multiple of 8 -> full-extent tile edge case.
    B3, S3, D3 = 1, 12, 128
    pe_c = build_pe_buffer(D3, max_len=64)
    x_c = jax.random.normal(k3, (B3, S3, D3), dtype=jnp.float32)
    out_c = jax.block_until_ready(positional_encoding(x_c, pe_c))
    ref_c = x_c + pe_c[None, :S3, :]
    np.testing.assert_allclose(np.asarray(out_c), np.asarray(ref_c), rtol=1e-6, atol=1e-6)

    print("KERNEL_OK")
</pallas_src>

<mosaic_0001>
module attributes {stable_mosaic.version = 11 : i64} {
  func.func @_pe_add_kernel(%arg0: i32, %arg1: memref<2x256xf32, #tpu.memory_space<vmem>>, %arg2: memref<1x256xf32, #tpu.memory_space<vmem>>, %arg3: memref<2x256xf32, #tpu.memory_space<vmem>>) attributes {dimension_semantics = [#tpu.dimension_semantics<parallel>], iteration_bounds = array<i64: 1>, scalar_prefetch = 0 : i64, scratch_operands = 0 : i64, tpu.core_type = #tpu.core_type<tc>, window_params = [{transform_indices = @transform_0, window_bounds = array<i64: 2, 256>}, {transform_indices = @transform_1, window_bounds = array<i64: 1, 256>}, {transform_indices = @transform_2, window_bounds = array<i64: 2, 256>}]} {
    %c0 = arith.constant 0 : index
    %c0_0 = arith.constant 0 : index
    %0 = vector.load %arg1[%c0, %c0_0] : memref<2x256xf32, #tpu.memory_space<vmem>>, vector<2x256xf32>
    %c0_1 = arith.constant 0 : index
    %c0_2 = arith.constant 0 : index
    %1 = vector.load %arg2[%c0_1, %c0_2] : memref<1x256xf32, #tpu.memory_space<vmem>>, vector<1x256xf32>
    %2 = vector.broadcast %1 : vector<1x256xf32> to vector<2x256xf32>
    %3 = arith.addf %0, %2 : vector<2x256xf32>
    %c0_3 = arith.constant 0 : index
    %c0_4 = arith.constant 0 : index
    %4 = vector.load %arg3[%c0_3, %c0_4] : memref<2x256xf32, #tpu.memory_space<vmem>>, vector<2x256xf32>
    tpu.vector_store %arg3[%c0_3, %c0_4], %3 {strides = array<i32>} : memref<2x256xf32, #tpu.memory_space<vmem>>, vector<2x256xf32>,
    return
  }
  func.func @transform_0(%arg0: i32) -> (i32, i32) {
    %c0_i32 = arith.constant 0 : i32
    %c0_i32_0 = arith.constant 0 : i32
    return %c0_i32, %arg0 : i32, i32
  }
  func.func @transform_1(%arg0: i32) -> (i32, i32) {
    %c0_i32 = arith.constant 0 : i32
    %c0_i32_0 = arith.constant 0 : i32
    return %c0_i32, %arg0 : i32, i32
  }
  func.func @transform_2(%arg0: i32) -> (i32, i32) {
    %c0_i32 = arith.constant 0 : i32
    %c0_i32_0 = arith.constant 0 : i32
    return %c0_i32, %arg0 : i32, i32
  }
}

</mosaic_0001>

<llo_original>
// kernel: tpu_custom_call.1
$region0: #{tpu_custom_call.1}
  #allocation0 [shape = 'u32[]', space=smem, size = 0x4, offset = 0x4, fixed_abs, tag = 'smem constant byte address 0x4 - core index']
  #allocation1 [shape = 'u32[72,128]{1,0:T(1,128)}', space=vmem, size = 0x9000, scoped, tag = 'internal scratch']
  %s0 = inlined_call_operand.hbm [shape: f32[2,256], index: 0, kind: input, shape index: {}]
  %s1 = inlined_call_operand.hbm [shape: f32[1,256], index: 1, kind: input, shape index: {}]
  %s2 = inlined_call_operand.hbm [shape: f32[2,256], index: 2, kind: output, shape index: {}]
  %s3 = sld [smem:[#allocation0]]
  $region26: #{tpu_custom_call.1} parent=0
    _
  %s5 = ssub.s32 1, %s3
  %s6 = scalar_select 0, %s5, %s3
  $region1: #{tpu_custom_call.1} parent=0
    #allocation2 [shape = 'u8[2048]{0}', space=vmem, size = 0x800, scoped, tag = 'input window, operand 0, single buffered']
    #allocation3 [shape = 's32[1]{0}', space=sflag, size = 0x4, scoped, tag = 'scoped memory for tpu_custom_call.1']
    #allocation4 [shape = 's32[1]{0}', space=sflag, size = 0x4, scoped, tag = 'scoped memory for tpu_custom_call.1']
    #allocation5 [shape = 'u8[1024]{0}', space=vmem, size = 0x400, scoped, tag = 'input window, operand 1, single buffered']
    #allocation6 [shape = 's32[1]{0}', space=sflag, size = 0x4, scoped, tag = 'scoped memory for tpu_custom_call.1']
    #allocation7 [shape = 'u8[2048]{0}', space=vmem, size = 0x800, scoped, tag = 'output window, operand 0, single buffered']
    %7 = vsyncpa [#allocation3], 0
    %8 = vsyncpa [#allocation6], 0
    %9 = vsyncpa [#allocation4], 0
    // Predicated region
    $region2: #{tpu_custom_call.1} parent=1 // pred_check
      _
    $region3: #{tpu_custom_call.1} parent=1 // pred_check_branch
      %11 = sbr.rel (0) target = $region5
    $region4: #{tpu_custom_call.1} parent=1 // pred_region
      %13 = vsyncadd [#allocation3], 0
      %s15 = sshll.u32 %s0, 4
      %s16 = int_to_ptr.hbm [resolvable:$true] %s15
      %s17 = sshll.u32 [#allocation2], 4
      %s18 = int_to_ptr.vmem [resolvable:$true] %s17
      %20 = dma.hbm_to_vmem [thread:$0]  %s16, 64, %s18, [#allocation3]
    $region5: #{tpu_custom_call.1} parent=1 // pred_fallthru
      _
    // Predicated region
    $region6: #{tpu_custom_call.1} parent=1 // pred_check
      _
    $region7: #{tpu_custom_call.1} parent=1 // pred_check_branch
      %22 = sbr.rel (0) target = $region9
    $region8: #{tpu_custom_call.1} parent=1 // pred_region
      %24 = vsyncadd [#allocation6], 0
      %s26 = sshll.u32 %s1, 4
      %s27 = int_to_ptr.hbm [resolvable:$true] %s26
      %s28 = sshll.u32 [#allocation5], 4
      %s29 = int_to_ptr.vmem [resolvable:$true] %s28
      %31 = dma.hbm_to_vmem [thread:$0]  %s27, 32, %s29, [#allocation6]
    $region9: #{tpu_custom_call.1} parent=1 // pred_fallthru
      _
    // Predicated region
    $region10: #{tpu_custom_call.1} parent=1 // pred_check
      _
    $region11: #{tpu_custom_call.1} parent=1 // pred_check_branch
      %33 = sbr.rel (0) target = $region13
    $region12: #{tpu_custom_call.1} parent=1 // pred_region
      %35 = dma.done [#allocation3], 64
    $region13: #{tpu_custom_call.1} parent=1 // pred_fallthru
      _
    // Predicated region
    $region14: #{tpu_custom_call.1} parent=1 // pred_check
      _
    $region15: #{tpu_custom_call.1} parent=1 // pred_check_branch
      %37 = sbr.rel (0) target = $region17
    $region16: #{tpu_custom_call.1} parent=1 // pred_region
      %39 = dma.done [#allocation6], 32
    $region17: #{tpu_custom_call.1} parent=1 // pred_fallthru
      _
    %v40 = vld [vmem:[#allocation2] sm:$0xf]
    %v41 = vld [vmem:[#allocation5] sm:$0x3]
    %v43 = vperm.slane %v41, 0
    %v44 = vperm.slane %v41, 1
    %v45 = vrot.slane %v44, 6
    %vm46 = vcmask 1041408
    %v47 = vsel %vm46, %v43, %v45
    %v49 = vadd.f32 %v40, %v47
    %50 = vst [vmem:[#allocation7] sm:$0xf] %v49
    // Predicated region
    $region18: #{tpu_custom_call.1} parent=1 // pred_check
      _
    $region19: #{tpu_custom_call.1} parent=1 // pred_check_branch
      %52 = sbr.rel (0) target = $region21
    $region20: #{tpu_custom_call.1} parent=1 // pred_region
      %54 = vsyncadd [#allocation4], 0
      %s56 = sshll.u32 [#allocation7], 4
      %s57 = int_to_ptr.vmem [resolvable:$true] %s56
      %s58 = sshll.u32 %s2, 4
      %s59 = int_to_ptr.hbm [resolvable:$true] %s58
      %61 = dma.vmem_to_hbm [thread:$0]  %s57, 64, %s59, [#allocation4]
    $region21: #{tpu_custom_call.1} parent=1 // pred_fallthru
      _
    // Predicated region
    $region22: #{tpu_custom_call.1} parent=1 // pred_check
      _
    $region23: #{tpu_custom_call.1} parent=1 // pred_check_branch
      %63 = sbr.rel (0) target = $region25
    $region24: #{tpu_custom_call.1} parent=1 // pred_region
      %65 = dma.done [#allocation4], 64
    $region25: #{tpu_custom_call.1} parent=1 // pred_fallthru
      _
    %66 = vsyncpa [#allocation3], 1
    %67 = vsyncpa [#allocation6], 1
    %68 = vsyncpa [#allocation4], 1

</llo_original>
